<compile_context>
chip_gen: v5e
topology: v5e:2x2
jax: 0.10.0
libtpu: 0.0.40
codegen_flags: <defaults>
</compile_context>

<pallas_src>
import math

import jax
import jax.numpy as jnp
from jax.experimental import pallas as pl
from jax.experimental.pallas import tpu as pltpu


_MIB = 1024 * 1024


# --------------------------------------------------------------------------
# Kernels: tiled matmul with f32 accumulator, with / without fused bias add.
# --------------------------------------------------------------------------
def _matmul_kernel(a_ref, b_ref, o_ref, acc_ref):
    @pl.when(pl.program_id(2) == 0)
    def _():
        acc_ref[...] = jnp.zeros_like(acc_ref)

    acc_ref[...] += jnp.dot(
        a_ref[...], b_ref[...], preferred_element_type=jnp.float32
    )

    @pl.when(pl.program_id(2) == pl.num_programs(2) - 1)
    def _():
        o_ref[...] = acc_ref[...].astype(o_ref.dtype)


def _matmul_bias_kernel(a_ref, b_ref, bias_ref, o_ref, acc_ref):
    @pl.when(pl.program_id(2) == 0)
    def _():
        acc_ref[...] = jnp.zeros_like(acc_ref)

    acc_ref[...] += jnp.dot(
        a_ref[...], b_ref[...], preferred_element_type=jnp.float32
    )

    @pl.when(pl.program_id(2) == pl.num_programs(2) - 1)
    def _():
        # bias is f32, added to the f32 accumulator before the final cast.
        o_ref[...] = (acc_ref[...] + bias_ref[...]).astype(o_ref.dtype)


# --------------------------------------------------------------------------
# Helpers.
# --------------------------------------------------------------------------
def _round_up(v, m):
    return ((v + m - 1) // m) * m


def _cdiv(a, b):
    return (a + b - 1) // b


def _balanced_tile(dim, max_tile, align, min_tiles=1):
    """Pick a tile <= max_tile, multiple of `align`, with near-equal tiles so
    padding is at most ~align per tile (never a nearly-full wasted tile).

    Returns (tile, n_tiles, padded_dim)."""
    dim_a = _round_up(dim, align)
    max_tile = max(align, min(_round_up(max_tile, align), dim_a))
    n = max(min_tiles, _cdiv(dim_a, max_tile))
    tile = _round_up(_cdiv(dim, n), align)
    n = _cdiv(dim_a, tile)
    return tile, n, n * tile


def _pad2d(x, rows, cols):
    r, c = x.shape
    if (r, c) == (rows, cols):
        return x
    return jnp.pad(x, ((0, rows - r), (0, cols - c)))


def _tpu_vmem_capacity_bytes():
    try:
        return int(pltpu.get_tpu_info().vmem_capacity_bytes)
    except Exception:
        return 64 * _MIB  # conservative (v7x per-TC VMEM)


def _vmem_limit_bytes(footprint_bytes):
    cap = _tpu_vmem_capacity_bytes()
    limit = max(32 * _MIB, int(1.5 * footprint_bytes))
    # Leave headroom below physical VMEM: ~48 MiB cap on 64-MiB v7x,
    # ~96 MiB cap on 128-MiB v5e/v6e.
    return int(min(limit, int(0.75 * cap)))


# --------------------------------------------------------------------------
# Wrapper: pad to aligned shapes, tile, call the kernel, slice back.
# --------------------------------------------------------------------------
def tiled_matmul(a, b, bias=None, *, tm=1024, tn=512, tk=512,
                 compute_dtype=jnp.bfloat16, out_dtype=None,
                 min_rows_for_split=256):
    """out = a @ b (+ bias), tiled Pallas matmul.

    a: [M, K], b: [K, N], bias: [N] or None.  Returns [M, N].
    Operands are cast to `compute_dtype` (bf16 by default); accumulation and
    the bias add are f32; the result is cast to `out_dtype`.
    """
    M, K = a.shape
    K2, N = b.shape
    assert K == K2, (a.shape, b.shape)
    out_dtype = out_dtype or a.dtype

    # Balanced tiles: sublane (rows) aligned to 8, lane dims aligned to 128.
    tn_eff, nj, Np = _balanced_tile(N, tn, 128)
    tk_eff, nk, Kp = _balanced_tile(K, tk, 128)
    tm_eff, ni, Mp = _balanced_tile(M, tm, 8)
    # Feed both v7x TensorCores: guarantee >=2 parallel tiles when there is
    # enough work (cheap no-op cost-wise on 1-TC v5e/v6e).
    if ni * nj == 1 and M >= min_rows_for_split:
        tm_eff, ni, Mp = _balanced_tile(M, tm, 8, min_tiles=2)

    a_p = _pad2d(a.astype(compute_dtype), Mp, Kp)
    b_p = _pad2d(b.astype(compute_dtype), Kp, Np)

    c_size = jnp.dtype(compute_dtype).itemsize
    o_size = jnp.dtype(out_dtype).itemsize

    # A (the big streamed operand, adj in stage 2) is the exposed-DMA path in
    # the memory-bound stage: deepen its pipelining when the k sweep is long.
    a_index = lambda i, j, k: (i, k)
    a_buffers = 3 if nk >= 3 else 2
    if a_buffers > 2:
        try:
            a_spec = pl.BlockSpec((tm_eff, tk_eff), a_index,
                                  pipeline_mode=pl.Buffered(a_buffers))
        except TypeError:  # older jax without pipeline_mode support
            a_buffers = 2
            a_spec = pl.BlockSpec((tm_eff, tk_eff), a_index)
    else:
        a_spec = pl.BlockSpec((tm_eff, tk_eff), a_index)

    in_specs = [a_spec, pl.BlockSpec((tk_eff, tn_eff), lambda i, j, k: (k, j))]
    operands = [a_p, b_p]

    if bias is None:
        kernel = _matmul_kernel
        bias_bytes = 0
    else:
        kernel = _matmul_bias_kernel
        bias_p = jnp.zeros((1, Np), jnp.float32).at[0, :N].set(
            bias.reshape(-1).astype(jnp.float32)
        )
        in_specs.append(pl.BlockSpec((1, tn_eff), lambda i, j, k: (0, j)))
        operands.append(bias_p)
        bias_bytes = Np * 4

    # VMEM footprint: multi-buffered a/b/out tiles + f32 accumulator + bias.
    footprint = (a_buffers * tm_eff * tk_eff * c_size
                 + 2 * tk_eff * tn_eff * c_size
                 + 2 * tm_eff * tn_eff * o_size
                 + tm_eff * tn_eff * 4
                 + 2 * tn_eff * 4)

    cost = pl.CostEstimate(
        flops=2 * Mp * Np * Kp,
        transcendentals=0,
        bytes_accessed=int(Mp * Kp * c_size * nj + Kp * Np * c_size * ni
                           + Mp * Np * o_size + bias_bytes),
    )

    out = pl.pallas_call(
        kernel,
        out_shape=jax.ShapeDtypeStruct((Mp, Np), out_dtype),
        grid_spec=pltpu.PrefetchScalarGridSpec(
            num_scalar_prefetch=0,
            grid=(ni, nj, nk),
            in_specs=in_specs,
            out_specs=pl.BlockSpec((tm_eff, tn_eff), lambda i, j, k: (i, j)),
            scratch_shapes=[pltpu.VMEM((tm_eff, tn_eff), jnp.float32)],
        ),
        compiler_params=pltpu.CompilerParams(
            # row/col tiles independent (megacore-shardable on v7x),
            # k is the reduction axis (accumulator carried across it).
            dimension_semantics=("parallel", "parallel", "arbitrary"),
            vmem_limit_bytes=_vmem_limit_bytes(footprint),
        ),
        cost_estimate=cost,
    )(*operands)

    if (Mp, Np) != (M, N):
        out = out[:M, :N]
    return out


def graph_convolution(x, adj, weight, bias=None, *,
                      compute_dtype=jnp.bfloat16):
    """GCN layer forward: adj @ (x @ weight) + bias."""
    n, f_in = x.shape
    f_out = weight.shape[1]
    assert adj.shape == (n, n)
    assert weight.shape == (f_in, f_out)

    # Chip-aware reduction tile: v5e/v6e (128 MiB VMEM) can afford tk=1024,
    # v7x (64 MiB / TC) stays at 512.
    tk = 1024 if _tpu_vmem_capacity_bytes() >= 100 * _MIB else 512

    # Stage 1 (hoisted, computed exactly once): support = X @ W, emitted in
    # bf16 so the memory-bound stage 2 streams half the bytes.
    support = tiled_matmul(x, weight, tm=1024, tn=512, tk=tk,
                           compute_dtype=compute_dtype,
                           out_dtype=compute_dtype)
    # Stage 2: out = adj @ support (+ bias).  tn=512 keeps the whole padded
    # F_out in one j tile (adj streamed exactly once); tm=1024 minimizes
    # support re-streaming per output-row tile.
    out = tiled_matmul(adj, support, bias=bias, tm=1024, tn=512, tk=tk,
                       compute_dtype=compute_dtype, out_dtype=x.dtype)
    return out


def init_params(key, in_features, out_features, with_bias=True,
                dtype=jnp.float32):
    """Matches GraphConvolution.reset_parameters:
    uniform(-stdv, stdv) with stdv = 1/sqrt(out_features)."""
    stdv = 1.0 / math.sqrt(out_features)
    kw, kb = jax.random.split(key)
    weight = jax.random.uniform(
        kw, (in_features, out_features), dtype=dtype, minval=-stdv, maxval=stdv
    )
    bias = (
        jax.random.uniform(kb, (out_features,), dtype=dtype,
                           minval=-stdv, maxval=stdv)
        if with_bias
        else None
    )
    return weight, bias


# --------------------------------------------------------------------------
# References for the self-test.
# --------------------------------------------------------------------------
def _reference_gcn(x, adj, weight, bias, *, mirror_bf16):
    """mirror_bf16=True replicates the kernel's numerics exactly (bf16
    operands + bf16 intermediate support, f32 accumulation); False is the
    exact f32 result."""
    hi = jax.lax.Precision.HIGHEST
    f32 = jnp.float32
    if mirror_bf16:
        xq = x.astype(jnp.bfloat16).astype(f32)
        wq = weight.astype(jnp.bfloat16).astype(f32)
        aq = adj.astype(jnp.bfloat16).astype(f32)
        sup = jnp.dot(xq, wq, precision=hi).astype(jnp.bfloat16).astype(f32)
    else:
        aq = adj.astype(f32)
        sup = jnp.dot(x.astype(f32), weight.astype(f32), precision=hi)
    out = jnp.dot(aq, sup, precision=hi)
    if bias is not None:
        out = out + bias.astype(f32)[None, :]
    return out


def _make_graph(key, n, f_in, f_out):
    k_x, k_adj, k_p = jax.random.split(key, 3)
    x = jax.random.normal(k_x, (n, f_in), dtype=jnp.float32)
    a = jax.random.uniform(k_adj, (n, n), dtype=jnp.float32)
    a = (a > 0.5).astype(jnp.float32)
    a = jnp.maximum(a, a.T) + jnp.eye(n, dtype=jnp.float32)
    adj = a / jnp.sum(a, axis=1, keepdims=True)
    weight, bias = init_params(k_p, f_in, f_out, with_bias=True)
    return x, adj, weight, bias


if __name__ == "__main__":
    key = jax.random.PRNGKey(0)

    # ---- small test (spec-scale shapes) -----------------------------------
    N, F_IN, F_OUT = 8, 16, 32
    x, adj, weight, bias = _make_graph(key, N, F_IN, F_OUT)

    out = jax.block_until_ready(graph_convolution(x, adj, weight, bias))
    assert out.shape == (N, F_OUT)

    ref_exact = _reference_gcn(x, adj, weight, bias, mirror_bf16=False)
    ref_mirror = _reference_gcn(x, adj, weight, bias, mirror_bf16=True)
    # bf16 compute with f32 accumulation: loose vs exact f32, tight vs the
    # bf16-mirrored reference.
    assert jnp.allclose(out, ref_exact, atol=5e-2, rtol=5e-2), (
        float(jnp.max(jnp.abs(out - ref_exact))))
    assert jnp.allclose(out, ref_mirror, atol=1e-3, rtol=1e-3), (
        float(jnp.max(jnp.abs(out - ref_mirror))))

    # no-bias path (separate kernel variant, no zero-bias DMA)
    out_nb = jax.block_until_ready(graph_convolution(x, adj, weight, None))
    ref_nb = _reference_gcn(x, adj, weight, None, mirror_bf16=True)
    assert jnp.allclose(out_nb, ref_nb, atol=1e-3, rtol=1e-3)

    # ---- medium test: exercises multi-tile grid, balanced-tile padding,
    # ---- >=2 parallel i-tiles and the Buffered(3) adj stream ---------------
    key2 = jax.random.PRNGKey(0)
    N2, F_IN2, F_OUT2 = 1100, 200, 160
    x2, adj2, weight2, bias2 = _make_graph(key2, N2, F_IN2, F_OUT2)
    out2 = jax.block_until_ready(graph_convolution(x2, adj2, weight2, bias2))
    assert out2.shape == (N2, F_OUT2)
    ref2 = _reference_gcn(x2, adj2, weight2, bias2, mirror_bf16=True)
    assert jnp.allclose(out2, ref2, atol=1e-2, rtol=1e-2), (
        float(jnp.max(jnp.abs(out2 - ref2))))

    print("KERNEL_OK")
</pallas_src>

<mosaic_0001>
module attributes {stable_mosaic.version = 11 : i64} {
  func.func @_matmul_kernel(%arg0: i32, %arg1: i32, %arg2: i32, %arg3: memref<8x128xbf16, #tpu.memory_space<vmem>>, %arg4: memref<128x128xbf16, #tpu.memory_space<vmem>>, %arg5: memref<8x128xbf16, #tpu.memory_space<vmem>>, %arg6: memref<8x128xf32, #tpu.memory_space<vmem>>) attributes {dimension_semantics = [#tpu.dimension_semantics<parallel>, #tpu.dimension_semantics<parallel>, #tpu.dimension_semantics<arbitrary>], iteration_bounds = array<i64: 1, 1, 1>, scalar_prefetch = 0 : i64, scratch_operands = 1 : i64, tpu.core_type = #tpu.core_type<tc>, window_params = [{transform_indices = @transform_0, window_bounds = array<i64: 8, 128>}, {transform_indices = @transform_1, window_bounds = array<i64: 128, 128>}, {transform_indices = @transform_2, window_bounds = array<i64: 8, 128>}]} {
    %c0_i32 = arith.constant 0 : i32
    %0 = arith.cmpi eq, %arg2, %c0_i32 : i32
    %1 = arith.extui %0 : i1 to i32
    %c0_i32_0 = arith.constant 0 : i32
    %2 = arith.cmpi ne, %1, %c0_i32_0 : i32
    scf.if %2 {
      %cst_10 = arith.constant 0.000000e+00 : f32
      %12 = vector.broadcast %cst_10 : f32 to vector<8x128xf32>
      %c0_11 = arith.constant 0 : index
      %c0_12 = arith.constant 0 : index
      %13 = vector.load %arg6[%c0_11, %c0_12] : memref<8x128xf32, #tpu.memory_space<vmem>>, vector<8x128xf32>
      tpu.vector_store %arg6[%c0_11, %c0_12], %12 {strides = array<i32>} : memref<8x128xf32, #tpu.memory_space<vmem>>, vector<8x128xf32>,
    } else {
    }
    %c0 = arith.constant 0 : index
    %c0_1 = arith.constant 0 : index
    %3 = vector.load %arg6[%c0, %c0_1] : memref<8x128xf32, #tpu.memory_space<vmem>>, vector<8x128xf32>
    %c0_2 = arith.constant 0 : index
    %c0_3 = arith.constant 0 : index
    %4 = vector.load %arg3[%c0_2, %c0_3] : memref<8x128xbf16, #tpu.memory_space<vmem>>, vector<8x128xbf16>
    %c0_4 = arith.constant 0 : index
    %c0_5 = arith.constant 0 : index
    %5 = vector.load %arg4[%c0_4, %c0_5] : memref<128x128xbf16, #tpu.memory_space<vmem>>, vector<128x128xbf16>
    %cst = arith.constant dense<0.000000e+00> : vector<8x128xf32>
    %6 = tpu.matmul %4, %5, %cst {dimension_numbers = #tpu.dot_dimension_numbers<[1], [0], [0], [1], [0, 0, 1, 1], [], []>} : vector<8x128xbf16>, vector<128x128xbf16>, vector<8x128xf32> -> vector<8x128xf32>
    %7 = arith.addf %3, %6 : vector<8x128xf32>
    %c0_6 = arith.constant 0 : index
    %c0_7 = arith.constant 0 : index
    %8 = vector.load %arg6[%c0_6, %c0_7] : memref<8x128xf32, #tpu.memory_space<vmem>>, vector<8x128xf32>
    tpu.vector_store %arg6[%c0_6, %c0_7], %7 {strides = array<i32>} : memref<8x128xf32, #tpu.memory_space<vmem>>, vector<8x128xf32>,
    %c0_i32_8 = arith.constant 0 : i32
    %9 = arith.cmpi eq, %arg2, %c0_i32_8 : i32
    %10 = arith.extui %9 : i1 to i32
    %c0_i32_9 = arith.constant 0 : i32
    %11 = arith.cmpi ne, %10, %c0_i32_9 : i32
    scf.if %11 {
      %c0_10 = arith.constant 0 : index
      %c0_11 = arith.constant 0 : index
      %12 = vector.load %arg6[%c0_10, %c0_11] : memref<8x128xf32, #tpu.memory_space<vmem>>, vector<8x128xf32>
      %13 = arith.truncf %12 : vector<8x128xf32> to vector<8x128xbf16>
      %c0_12 = arith.constant 0 : index
      %c0_13 = arith.constant 0 : index
      %14 = vector.load %arg5[%c0_12, %c0_13] : memref<8x128xbf16, #tpu.memory_space<vmem>>, vector<8x128xbf16>
      tpu.vector_store %arg5[%c0_12, %c0_13], %13 {strides = array<i32>} : memref<8x128xbf16, #tpu.memory_space<vmem>>, vector<8x128xbf16>,
    } else {
    }
    return
  }
  func.func @transform_0(%arg0: i32, %arg1: i32, %arg2: i32) -> (i32, i32) {
    %c0_i32 = arith.constant 0 : i32
    return %arg0, %arg2 : i32, i32
  }
  func.func @transform_1(%arg0: i32, %arg1: i32, %arg2: i32) -> (i32, i32) {
    %c0_i32 = arith.constant 0 : i32
    return %arg2, %arg1 : i32, i32
  }
  func.func @transform_2(%arg0: i32, %arg1: i32, %arg2: i32) -> (i32, i32) {
    %c0_i32 = arith.constant 0 : i32
    return %arg0, %arg1 : i32, i32
  }
}

</mosaic_0001>

<llo_original>
// kernel: tpu_custom_call.1
$region0: #{tpu_custom_call.1}
  #allocation0 [shape = 'u32[]', space=smem, size = 0x4, offset = 0x4, fixed_abs, tag = 'smem constant byte address 0x4 - core index']
  #allocation1 [shape = 'u32[72,128]{1,0:T(1,128)}', space=vmem, size = 0x9000, scoped, tag = 'internal scratch']
  #allocation2 [shape = 'f32[8,128]{1,0:T(8,128)}', space=vmem, size = 0x1000, scoped, tag = 'scratch operand']
  %s0 = inlined_call_operand.hbm [shape: bf16[8,128], index: 0, kind: input, shape index: {}]
  %s1 = inlined_call_operand.hbm [shape: bf16[128,128], index: 1, kind: input, shape index: {}]
  %s2 = inlined_call_operand.hbm [shape: bf16[8,128], index: 2, kind: output, shape index: {}]
  %s3 = sld [smem:[#allocation0]]
  $region34: #{tpu_custom_call.1} parent=0
    _
  %s5 = ssub.s32 1, %s3
  %s6 = scalar_select 0, %s5, %s3
  $region1: #{tpu_custom_call.1} parent=0
    #allocation3 [shape = 'u8[2048]{0}', space=vmem, size = 0x800, scoped, tag = 'input window, operand 0, single buffered']
    #allocation4 [shape = 's32[1]{0}', space=sflag, size = 0x4, scoped, tag = 'scoped memory for tpu_custom_call.1']
    #allocation5 [shape = 's32[1]{0}', space=sflag, size = 0x4, scoped, tag = 'scoped memory for tpu_custom_call.1']
    #allocation6 [shape = 'u8[32768]{0}', space=vmem, size = 0x8000, scoped, tag = 'input window, operand 1, single buffered']
    #allocation7 [shape = 's32[1]{0}', space=sflag, size = 0x4, scoped, tag = 'scoped memory for tpu_custom_call.1']
    #allocation8 [shape = 'u8[2048]{0}', space=vmem, size = 0x800, scoped, tag = 'output window, operand 0, single buffered']
    %7 = vsyncpa [#allocation4], 0
    %8 = vsyncpa [#allocation7], 0
    %9 = vsyncpa [#allocation5], 0
    // Predicated region
    $region2: #{tpu_custom_call.1} parent=1 // pred_check
      _
    $region3: #{tpu_custom_call.1} parent=1 // pred_check_branch
      %11 = sbr.rel (0) target = $region5
    $region4: #{tpu_custom_call.1} parent=1 // pred_region
      %13 = vsyncadd [#allocation4], 0
      %s15 = sshll.u32 %s0, 4
      %s16 = int_to_ptr.hbm [resolvable:$true] %s15
      %s17 = sshll.u32 [#allocation3], 4
      %s18 = int_to_ptr.vmem [resolvable:$true] %s17
      %20 = dma.hbm_to_vmem [thread:$0]  %s16, 64, %s18, [#allocation4]
    $region5: #{tpu_custom_call.1} parent=1 // pred_fallthru
      _
    // Predicated region
    $region6: #{tpu_custom_call.1} parent=1 // pred_check
      _
    $region7: #{tpu_custom_call.1} parent=1 // pred_check_branch
      %22 = sbr.rel (0) target = $region9
    $region8: #{tpu_custom_call.1} parent=1 // pred_region
      %24 = vsyncadd [#allocation7], 0
      %s25 = sshll.u32 %s1, 4
      %s26 = int_to_ptr.hbm [resolvable:$true] %s25
      %s27 = sshll.u32 [#allocation6], 4
      %s28 = int_to_ptr.vmem [resolvable:$true] %s27
      %33 = dma.hbm_to_vmem [thread:$0]  %s26, 1024, %s28, [#allocation7], 64, 64, 4
    $region9: #{tpu_custom_call.1} parent=1 // pred_fallthru
      _
    // Predicated region
    $region10: #{tpu_custom_call.1} parent=1 // pred_check
      _
    $region11: #{tpu_custom_call.1} parent=1 // pred_check_branch
      %35 = sbr.rel (0) target = $region13
    $region12: #{tpu_custom_call.1} parent=1 // pred_region
      %37 = dma.done [#allocation4], 64
    $region13: #{tpu_custom_call.1} parent=1 // pred_fallthru
      _
    // Predicated region
    $region14: #{tpu_custom_call.1} parent=1 // pred_check
      _
    $region15: #{tpu_custom_call.1} parent=1 // pred_check_branch
      %39 = sbr.rel (0) target = $region17
    $region16: #{tpu_custom_call.1} parent=1 // pred_region
      %41 = dma.done [#allocation7], 1024
    $region17: #{tpu_custom_call.1} parent=1 // pred_fallthru
      _
    %p42 = scmp.eq.s32.totalorder 0, 0
    // Predicated region
    $region18: #{tpu_custom_call.1} parent=1 // pred_check
      %p43 = pneg %p42
    $region19: #{tpu_custom_call.1} parent=1 // pred_check_branch
      %45 = sbr.rel (%p43) target = $region21
    $region20: #{tpu_custom_call.1} parent=1 // pred_region
      %46 = vst [vmem:[#allocation2] sm:$0xff] 0.0
    $region21: #{tpu_custom_call.1} parent=1 // pred_fallthru
      _
    %v47 = vld [vmem:[#allocation2] sm:$0xff]
    %v48 = vld [vmem:[#allocation3] sm:$0xf]
    %v49 = vld [vmem:[#allocation6] sm:$0xf]
    %v50 = vld [vmem:[#allocation6 + $0x4] sm:$0xf]
    %v51 = vld [vmem:[#allocation6 + $0x8] sm:$0xf]
    %v52 = vld [vmem:[#allocation6 + $0xc] sm:$0xf]
    %v53 = vld [vmem:[#allocation6 + $0x10] sm:$0xf]
    %v54 = vld [vmem:[#allocation6 + $0x14] sm:$0xf]
    %v55 = vld [vmem:[#allocation6 + $0x18] sm:$0xf]
    %v56 = vld [vmem:[#allocation6 + $0x1c] sm:$0xf]
    %v57 = vld [vmem:[#allocation6 + $0x20] sm:$0xf]
    %v58 = vld [vmem:[#allocation6 + $0x24] sm:$0xf]
    %v59 = vld [vmem:[#allocation6 + $0x28] sm:$0xf]
    %v60 = vld [vmem:[#allocation6 + $0x2c] sm:$0xf]
    %v61 = vld [vmem:[#allocation6 + $0x30] sm:$0xf]
    %v62 = vld [vmem:[#allocation6 + $0x34] sm:$0xf]
    %v63 = vld [vmem:[#allocation6 + $0x38] sm:$0xf]
    %v64 = vld [vmem:[#allocation6 + $0x3c] sm:$0xf]
    %v81 = vunpack.c.l.b16 %v49
    %v82 = vunpack.c.l.b16 %v50
    %v83 = vunpack.c.l.b16 %v51
    %v84 = vunpack.c.l.b16 %v52
    %v85 = vunpack.c.l.b16 %v53
    %v86 = vunpack.c.l.b16 %v54
    %v87 = vunpack.c.l.b16 %v55
    %v88 = vunpack.c.l.b16 %v56
    %v89 = vunpack.c.l.b16 %v57
    %v90 = vunpack.c.l.b16 %v58
    %v91 = vunpack.c.l.b16 %v59
    %v92 = vunpack.c.l.b16 %v60
    %v93 = vunpack.c.l.b16 %v61
    %v94 = vunpack.c.l.b16 %v62
    %v95 = vunpack.c.l.b16 %v63
    %v96 = vunpack.c.l.b16 %v64
    %v97 = vpack.c.b16 %v82, %v81
    %v98 = vpack.c.b16 %v84, %v83
    %v99 = vpack.c.b16 %v86, %v85
    %v100 = vpack.c.b16 %v88, %v87
    %v101 = vpack.c.b16 %v90, %v89
    %v102 = vpack.c.b16 %v92, %v91
    %v103 = vpack.c.b16 %v94, %v93
    %v104 = vpack.c.b16 %v96, %v95
    %113 = vmatpush.bf16.msra.mxu0 %v104
    %114 = vmatpush.bf16.msra.mxu0 %v103
    %115 = vmatpush.bf16.msra.mxu0 %v102
    %116 = vmatpush.bf16.msra.mxu0 %v101
    %117 = vmatpush.bf16.msra.mxu0 %v100
    %118 = vmatpush.bf16.msra.mxu0 %v99
    %119 = vmatpush.bf16.msra.mxu0 %v98
    %120 = vmatpush.bf16.msra.mxu0 %v97
    %121 = vmatmul.bf16.gmra.mxu0 %v48
    %v122 = vpop.f32.mrf.mxu0
    %v123 = vadd.f32 0.0, %v122
    %v124 = vpop.f32.mrf.mxu0
    %125 = vdwg.mxu0
    %v126 = vadd.f32 %v47, %v123
    %127 = vst [vmem:[#allocation2] sm:$0xff] %v126
    // Predicated region
    $region22: #{tpu_custom_call.1} parent=1 // pred_check
      %p128 = pneg %p42
    $region23: #{tpu_custom_call.1} parent=1 // pred_check_branch
      %130 = sbr.rel (%p128) target = $region25
    $region24: #{tpu_custom_call.1} parent=1 // pred_region
      %v131 = vld [vmem:[#allocation2] sm:$0xff]
      %v132 = vpack.c.bf16 %v131, %v131
      %133 = vst [vmem:[#allocation8] sm:$0xf] %v132
    $region25: #{tpu_custom_call.1} parent=1 // pred_fallthru
      _
    // Predicated region
    $region26: #{tpu_custom_call.1} parent=1 // pred_check
      _
    $region27: #{tpu_custom_call.1} parent=1 // pred_check_branch
      %135 = sbr.rel (0) target = $region29
    $region28: #{tpu_custom_call.1} parent=1 // pred_region
      %137 = vsyncadd [#allocation5], 0
      %s139 = sshll.u32 [#allocation8], 4
      %s140 = int_to_ptr.vmem [resolvable:$true] %s139
      %s141 = sshll.u32 %s2, 4
      %s142 = int_to_ptr.hbm [resolvable:$true] %s141
      %144 = dma.vmem_to_hbm [thread:$0]  %s140, 64, %s142, [#allocation5]
    $region29: #{tpu_custom_call.1} parent=1 // pred_fallthru
      _
    // Predicated region
    $region30: #{tpu_custom_call.1} parent=1 // pred_check
      _
    $region31: #{tpu_custom_call.1} parent=1 // pred_check_branch
      %146 = sbr.rel (0) target = $region33
    $region32: #{tpu_custom_call.1} parent=1 // pred_region
      %148 = dma.done [#allocation5], 64
    $region33: #{tpu_custom_call.1} parent=1 // pred_fallthru
      _
    %149 = vsyncpa [#allocation4], 1
    %150 = vsyncpa [#allocation7], 1
    %151 = vsyncpa [#allocation5], 1

</llo_original>
